<compile_context>
chip_gen: v6e
topology: v6e:2x2x1
jax: 0.10.0
libtpu: 0.0.40
codegen_flags: <defaults>
</compile_context>

<pallas_src>
import functools
import math

import numpy as np
import jax
import jax.numpy as jnp
from jax.experimental import pallas as pl
from jax.experimental.pallas import tpu as pltpu

INV_SQRT_2 = 1.0 / math.sqrt(2.0)
SILU_SCALE = 1.0 / 0.6  # GemNet "swish" == ScaledSiLU


def _scaled_silu(x):
    return jax.nn.silu(x) * SILU_SCALE


def _pad_rows(x, n_rows):
    pad = n_rows - x.shape[0]
    if pad == 0:
        return x
    return jnp.pad(x, ((0, pad),) + ((0, 0),) * (x.ndim - 1))


def _auto_tile(n_edges):
    # Aim for >= 8 grid steps (>= 4 per TensorCore on v7x megacore);
    # tile in [128, 512], multiple of 128 for clean MXU / lane mapping.
    t = (n_edges // 8) // 128 * 128
    return int(min(512, max(128, t)))


# --------------------------------------------------------------------------
# Kernel A: fused edge MLP
#   x_ba = swish(m @ W_ba); rbf = rbf3 @ W_rbf
#   x    = (x_ba * rbf) * scale_rbf
#   out  = swish(x @ W_down)            (down_projection), bf16 output
# Kernel A is HBM-bound; its only real lever would be removing the x_ba HBM
# intermediate entirely (blocked by the data-dependent triplet gather).
# --------------------------------------------------------------------------
def _edge_mlp_kernel(m_ref, rbf_ref, w_ba_ref, w_rbf_ref, w_down_ref, out_ref,
                     *, scale_rbf):
    x_ba = jnp.dot(m_ref[...], w_ba_ref[...], preferred_element_type=jnp.float32)
    x_ba = _scaled_silu(x_ba)
    mlp_rbf = jnp.dot(rbf_ref[...], w_rbf_ref[...],
                      preferred_element_type=jnp.float32)
    x = x_ba * mlp_rbf * scale_rbf
    x = jnp.dot(x.astype(jnp.bfloat16), w_down_ref[...],
                preferred_element_type=jnp.float32)
    out_ref[...] = _scaled_silu(x).astype(out_ref.dtype)


def edge_mlp(m, rbf3, w_ba, w_rbf, w_down, scale_rbf, *, tile):
    nE_pad, E = m.shape
    R = rbf3.shape[1]
    T = w_down.shape[1]
    kern = functools.partial(_edge_mlp_kernel, scale_rbf=scale_rbf)
    return pl.pallas_call(
        kern,
        out_shape=jax.ShapeDtypeStruct((nE_pad, T), jnp.bfloat16),
        grid_spec=pltpu.PrefetchScalarGridSpec(
            num_scalar_prefetch=0,
            grid=(nE_pad // tile,),
            in_specs=[
                pl.BlockSpec((tile, E), lambda i: (i, 0)),
                pl.BlockSpec((tile, R), lambda i: (i, 0)),
                pl.BlockSpec((E, E), lambda i: (0, 0)),
                pl.BlockSpec((R, E), lambda i: (0, 0)),
                pl.BlockSpec((E, T), lambda i: (0, 0)),
            ],
            out_specs=pl.BlockSpec((tile, T), lambda i: (i, 0)),
        ),
        compiler_params=pltpu.CompilerParams(dimension_semantics=("parallel",)),
    )(m, rbf3, w_ba, w_rbf, w_down)


# --------------------------------------------------------------------------
# Kernel B (fused): EfficientInteractionBilinear + scale_cbf_sum + up_ca/up_ac
#
#   inputs per edge tile (all lane-dense 2-D):
#     A   (tile, C*K)   A[e, c*K+k] = sum_s rbf_W1[e,c,s] * sph[e,k,s]
#     m2  (tile, K*T)   m2[e, k*T+t] = x_ba[src(e,k), t]
#   per tile:
#     rcs_c[e,t] = sum_k A[e,c,k] * m2[e,k,t]       (VPU broadcast-FMA, f32)
#     x[e,o]    += rcs_c @ W[:,c,:]                  (C real MXU matmuls, f32)
#     x         *= scale_cbf
#     y          = swish(x @ [W_up_ca | W_up_ac])    (one (O,2E) MXU matmul)
#     x_ca, x_ac = y[:, :E], y[:, E:]                (bf16, 128-lane dense)
# --------------------------------------------------------------------------
def _bilinear_up_kernel(a_ref, m2_ref, wflat_ref, wup_ref, xca_ref, xac_ref,
                        *, scale_cbf, C, K, T, E):
    af = a_ref[...].astype(jnp.float32)      # (tile, C*K)
    m2f = m2_ref[...].astype(jnp.float32)    # (tile, K*T)
    wf = wflat_ref[...]                      # (C*T, O) bf16

    # hoist the K per-k slices of m2 (reused for every c)
    m2s = [m2f[:, k * T:(k + 1) * T] for k in range(K)]

    x = None
    for c in range(C):
        # rcs_c[e, t] = sum_k A[e, c, k] * m2[e, k, t]   -- no per-edge matmuls
        rcs_c = None
        for k in range(K):
            idx = c * K + k
            term = af[:, idx:idx + 1] * m2s[k]           # (tile,1)*(tile,T)
            rcs_c = term if rcs_c is None else rcs_c + term
        # bilinear + sum over (c, t): accumulate C shared-weight MXU matmuls
        pc = jnp.dot(rcs_c.astype(jnp.bfloat16), wf[c * T:(c + 1) * T, :],
                     preferred_element_type=jnp.float32)
        x = pc if x is None else x + pc

    x = x * scale_cbf                                     # scale_cbf_sum, f32

    # fused up_projection_ca / up_projection_ac: one N=2E(=256) matmul
    y = _scaled_silu(jnp.dot(x.astype(jnp.bfloat16), wup_ref[...],
                             preferred_element_type=jnp.float32))
    xca_ref[...] = y[:, :E].astype(xca_ref.dtype)
    xac_ref[...] = y[:, E:].astype(xac_ref.dtype)


def bilinear_up(a_edge, m2, w_flat, w_up, scale_cbf, *, C, K, T, E, tile):
    nE_pad = a_edge.shape[0]
    O = w_flat.shape[1]
    kern = functools.partial(_bilinear_up_kernel, scale_cbf=scale_cbf,
                             C=C, K=K, T=T, E=E)
    return pl.pallas_call(
        kern,
        out_shape=(jax.ShapeDtypeStruct((nE_pad, E), jnp.bfloat16),
                   jax.ShapeDtypeStruct((nE_pad, E), jnp.bfloat16)),
        grid_spec=pltpu.PrefetchScalarGridSpec(
            num_scalar_prefetch=0,
            grid=(nE_pad // tile,),
            in_specs=[
                pl.BlockSpec((tile, C * K), lambda i: (i, 0)),
                pl.BlockSpec((tile, K * T), lambda i: (i, 0)),
                pl.BlockSpec((C * T, O), lambda i: (0, 0)),
                pl.BlockSpec((O, 2 * E), lambda i: (0, 0)),
            ],
            out_specs=[
                pl.BlockSpec((tile, E), lambda i: (i, 0)),
                pl.BlockSpec((tile, E), lambda i: (i, 0)),
            ],
        ),
        compiler_params=pltpu.CompilerParams(dimension_semantics=("parallel",)),
    )(a_edge, m2, w_flat, w_up)


# --------------------------------------------------------------------------
# Full TripletInteraction forward
# --------------------------------------------------------------------------
def triplet_interaction(params, m, rbf3, cbf3, Kidx3, id_swap,
                        id3_expand_ba, id3_reduce_ca, *, Kmax, tile=None):
    rbf_w1, sph = cbf3                       # (nE, C, S), (nE, Kmax, S)
    nE, E = m.shape
    T = params["w_down"].shape[1]
    C = rbf_w1.shape[1]
    O = params["w_up_ca"].shape[0]
    if tile is None:
        tile = _auto_tile(nE)
    nE_pad = -(-nE // tile) * tile

    bf16 = jnp.bfloat16
    m_p = _pad_rows(m.astype(bf16), nE_pad)
    rbf3_p = _pad_rows(rbf3.astype(bf16), nE_pad)

    # kernel A: dense_ba / mlp_rbf / scale_rbf / down_projection (fused)
    x_ba = edge_mlp(m_p, rbf3_p,
                    params["w_ba"].astype(bf16),
                    params["w_rbf"].astype(bf16),
                    params["w_down"].astype(bf16),
                    params["scale_rbf"], tile=tile)          # (nE_pad, T) bf16

    # TODO(synk): the triplet gather/scatter stays in XLA glue.  The scatter is
    # now only an int32 row-index table (64x less scatter data than before);
    # fusing the row gather into kernel B (scalar-prefetched table + manual
    # DMA) would also remove the dense m2 HBM intermediate.
    src = jnp.full((nE_pad, Kmax), nE_pad, jnp.int32)
    src = src.at[id3_reduce_ca, Kidx3].set(id3_expand_ba.astype(jnp.int32))
    x_ba_ext = jnp.concatenate([x_ba, jnp.zeros((1, T), x_ba.dtype)], axis=0)
    m2 = x_ba_ext[src.reshape(-1)].reshape(nE_pad, Kmax * T)  # (nE_pad, K*T) bf16

    # Pre-contract the per-edge basis product in glue (S=8, fused on the VPU):
    #   A[e, c, k] = sum_s rbf_W1[e, c, s] * sph[e, k, s]
    a_edge = (rbf_w1[:, :, None, :] * sph[:, None, :, :]).sum(-1)     # (nE,C,K) f32
    a_edge = _pad_rows(a_edge.reshape(nE, C * Kmax).astype(bf16), nE_pad)

    # host-side weight prep: bilinear (T,C,O) -> (C*T, O); fused up-proj (O, 2E)
    w_flat = jnp.transpose(params["w_bilinear"], (1, 0, 2)).reshape(C * T, O).astype(bf16)
    w_up = jnp.concatenate([params["w_up_ca"], params["w_up_ac"]], axis=1).astype(bf16)

    # kernel B: bilinear + scale_cbf_sum + up_projection_ca / up_projection_ac
    x_ca, x_ac = bilinear_up(a_edge, m2, w_flat, w_up, params["scale_cbf"],
                             C=C, K=Kmax, T=T, E=E, tile=tile)

    x_ca = x_ca[:nE].astype(jnp.float32)
    x_ac = x_ac[:nE].astype(jnp.float32)
    # TODO(synk): id_swap permutation + add + 1/sqrt(2) stays in XLA glue
    # (cross-tile gather; XLA fuses gather+add+scale into one pass).
    return (x_ca + x_ac[id_swap]) * INV_SQRT_2


# --------------------------------------------------------------------------
# Pure-JAX f32 reference (mirrors the torch code exactly)
# --------------------------------------------------------------------------
def ref_forward(params, m, rbf3, cbf3, Kidx3, id_swap,
                id3_expand_ba, id3_reduce_ca, Kmax):
    rbf_w1, sph = cbf3
    x_ba = _scaled_silu(m @ params["w_ba"])
    mlp_rbf = rbf3 @ params["w_rbf"]
    x_ba2 = x_ba * mlp_rbf
    x_ba = x_ba2 * params["scale_rbf"]              # ScalingFactor(scale_rbf)
    x_ba = _scaled_silu(x_ba @ params["w_down"])
    x_ba = x_ba[id3_expand_ba]

    nE = rbf_w1.shape[0]
    T = x_ba.shape[1]
    m2 = jnp.zeros((nE, Kmax, T), x_ba.dtype).at[id3_reduce_ca, Kidx3].set(x_ba)
    sum_k = jnp.einsum("eks,ekt->est", sph, m2)               # sph^T @ m2
    rcs = jnp.einsum("ecs,est->ect", rbf_w1, sum_k)           # rbf_W1 @ sum_k
    x = jnp.einsum("ect,tco->eo", rcs, params["w_bilinear"])  # bilinear + sum
    x = x * params["scale_cbf"]                               # ScalingFactor(scale_cbf)

    x_ca = _scaled_silu(x @ params["w_up_ca"])
    x_ac = _scaled_silu(x @ params["w_up_ac"])
    x_ac = x_ac[id_swap]
    return (x_ca + x_ac) * INV_SQRT_2


# --------------------------------------------------------------------------
if __name__ == "__main__":
    # sizes (GemNet-typical, kept small)
    emb_size_edge = 128     # E
    emb_size_rbf = 16       # R
    emb_size_trip = 64      # T
    emb_size_cbf = 16       # C
    emb_size_bilinear = 64  # O
    num_spherical = 8       # S
    nE = 512                # edges
    K_per = 8               # triplets per edge -> Kmax
    nT = nE * K_per         # triplets

    key = jax.random.PRNGKey(0)
    keys = jax.random.split(key, 12)

    def init_w(k, shape):
        fan_in = shape[0] if len(shape) == 2 else shape[0] * shape[1]
        return (jax.random.normal(k, shape, jnp.float32) / math.sqrt(fan_in))

    w_bilinear = init_w(keys[5], (emb_size_trip, emb_size_cbf, emb_size_bilinear))
    params = {
        "w_ba": init_w(keys[0], (emb_size_edge, emb_size_edge)),
        "w_rbf": init_w(keys[1], (emb_size_rbf, emb_size_edge)),
        "w_down": init_w(keys[2], (emb_size_edge, emb_size_trip)),
        "w_up_ca": init_w(keys[3], (emb_size_bilinear, emb_size_edge)),
        "w_up_ac": init_w(keys[4], (emb_size_bilinear, emb_size_edge)),
        "w_bilinear": w_bilinear,                  # (T, C, O) as in torch
        "scale_rbf": 0.8,
        "scale_cbf": 0.6,
    }

    # inputs
    m = jax.random.normal(keys[6], (nE, emb_size_edge), jnp.float32)
    rbf3 = jax.random.normal(keys[7], (nE, emb_size_rbf), jnp.float32)
    rbf_w1 = jax.random.normal(keys[8], (nE, emb_size_cbf, num_spherical), jnp.float32)
    sph = jax.random.normal(keys[9], (nE, K_per, num_spherical), jnp.float32)
    cbf3 = (rbf_w1, sph)

    # triplet index structure: each edge has exactly K_per incoming triplets
    perm = np.asarray(jax.random.permutation(keys[10], nT))
    id3_reduce_ca = jnp.asarray(np.repeat(np.arange(nE), K_per)[perm], jnp.int32)
    Kidx3 = jnp.asarray(np.tile(np.arange(K_per), nE)[perm], jnp.int32)
    id3_expand_ba = jax.random.randint(keys[11], (nT,), 0, nE, jnp.int32)
    # id_swap: pair edge 2i <-> 2i+1 (a valid permutation, as in GemNet)
    id_swap = jnp.asarray(np.arange(nE).reshape(-1, 2)[:, ::-1].reshape(-1), jnp.int32)
    Kmax = K_per  # == max(Kidx3) + 1, matching the torch Kmax computation

    out = triplet_interaction(params, m, rbf3, cbf3, Kidx3, id_swap,
                              id3_expand_ba, id3_reduce_ca, Kmax=Kmax)
    out = jax.block_until_ready(out)

    ref = jax.block_until_ready(
        ref_forward(params, m, rbf3, cbf3, Kidx3, id_swap,
                    id3_expand_ba, id3_reduce_ca, Kmax))

    out_np = np.asarray(out, dtype=np.float32)
    ref_np = np.asarray(ref, dtype=np.float32)

    assert out.shape == (nE, emb_size_edge)
    assert np.all(np.isfinite(out_np))
    # bf16 MXU operands with f32 accumulation: check error relative to the
    # output scale (f32 reference).
    err = float(np.max(np.abs(out_np - ref_np)))
    scale = float(np.max(np.abs(ref_np)))
    assert err <= 5e-2 * scale, "max abs diff %g (scale %g)" % (err, scale)
    print("KERNEL_OK")
</pallas_src>

<mosaic_0001>
module attributes {stable_mosaic.version = 11 : i64} {
  func.func @_edge_mlp_kernel(%arg0: i32, %arg1: memref<128x128xbf16, #tpu.memory_space<vmem>>, %arg2: memref<128x16xbf16, #tpu.memory_space<vmem>>, %arg3: memref<128x128xbf16, #tpu.memory_space<vmem>>, %arg4: memref<16x128xbf16, #tpu.memory_space<vmem>>, %arg5: memref<128x64xbf16, #tpu.memory_space<vmem>>, %arg6: memref<128x64xbf16, #tpu.memory_space<vmem>>) attributes {dimension_semantics = [#tpu.dimension_semantics<parallel>], iteration_bounds = array<i64: 4>, scalar_prefetch = 0 : i64, scratch_operands = 0 : i64, tpu.core_type = #tpu.core_type<tc>, window_params = [{transform_indices = @transform_0, window_bounds = array<i64: 128, 128>}, {transform_indices = @transform_1, window_bounds = array<i64: 128, 16>}, {pipeline_mode = #tpu.pipeline_mode<synchronous>, transform_indices = @transform_2, window_bounds = array<i64: 128, 128>}, {pipeline_mode = #tpu.pipeline_mode<synchronous>, transform_indices = @transform_3, window_bounds = array<i64: 16, 128>}, {pipeline_mode = #tpu.pipeline_mode<synchronous>, transform_indices = @transform_4, window_bounds = array<i64: 128, 64>}, {transform_indices = @transform_5, window_bounds = array<i64: 128, 64>}]} {
    %c0 = arith.constant 0 : index
    %c0_0 = arith.constant 0 : index
    %0 = vector.load %arg1[%c0, %c0_0] : memref<128x128xbf16, #tpu.memory_space<vmem>>, vector<128x128xbf16>
    %c0_1 = arith.constant 0 : index
    %c0_2 = arith.constant 0 : index
    %1 = vector.load %arg3[%c0_1, %c0_2] : memref<128x128xbf16, #tpu.memory_space<vmem>>, vector<128x128xbf16>
    %cst = arith.constant dense<0.000000e+00> : vector<128x128xf32>
    %2 = tpu.matmul %0, %1, %cst {dimension_numbers = #tpu.dot_dimension_numbers<[1], [0], [0], [1], [0, 0, 1, 1], [], []>} : vector<128x128xbf16>, vector<128x128xbf16>, vector<128x128xf32> -> vector<128x128xf32>
    %3 = arith.negf %2 : vector<128x128xf32>
    %4 = math.exp %3 : vector<128x128xf32>
    %cst_3 = arith.constant 1.000000e+00 : f32
    %5 = vector.broadcast %cst_3 : f32 to vector<128x128xf32>
    %6 = arith.addf %5, %4 : vector<128x128xf32>
    %7 = arith.divf %5, %6 : vector<128x128xf32>
    %8 = arith.mulf %2, %7 : vector<128x128xf32>
    %cst_4 = arith.constant 1.66666663 : f32
    %9 = vector.broadcast %cst_4 : f32 to vector<128x128xf32>
    %10 = arith.mulf %8, %9 : vector<128x128xf32>
    %c0_5 = arith.constant 0 : index
    %c0_6 = arith.constant 0 : index
    %11 = vector.load %arg2[%c0_5, %c0_6] : memref<128x16xbf16, #tpu.memory_space<vmem>>, vector<128x16xbf16>
    %c0_7 = arith.constant 0 : index
    %c0_8 = arith.constant 0 : index
    %12 = vector.load %arg4[%c0_7, %c0_8] : memref<16x128xbf16, #tpu.memory_space<vmem>>, vector<16x128xbf16>
    %cst_9 = arith.constant dense<0.000000e+00> : vector<128x128xf32>
    %13 = tpu.matmul %11, %12, %cst_9 {dimension_numbers = #tpu.dot_dimension_numbers<[1], [0], [0], [1], [0, 0, 1, 1], [], []>} : vector<128x16xbf16>, vector<16x128xbf16>, vector<128x128xf32> -> vector<128x128xf32>
    %14 = arith.mulf %10, %13 : vector<128x128xf32>
    %cst_10 = arith.constant 8.000000e-01 : f32
    %15 = vector.broadcast %cst_10 : f32 to vector<128x128xf32>
    %16 = arith.mulf %14, %15 : vector<128x128xf32>
    %17 = arith.truncf %16 : vector<128x128xf32> to vector<128x128xbf16>
    %c0_11 = arith.constant 0 : index
    %c0_12 = arith.constant 0 : index
    %18 = vector.load %arg5[%c0_11, %c0_12] : memref<128x64xbf16, #tpu.memory_space<vmem>>, vector<128x64xbf16>
    %cst_13 = arith.constant dense<0.000000e+00> : vector<128x64xf32>
    %19 = tpu.matmul %17, %18, %cst_13 {dimension_numbers = #tpu.dot_dimension_numbers<[1], [0], [0], [1], [0, 0, 1, 1], [], []>} : vector<128x128xbf16>, vector<128x64xbf16>, vector<128x64xf32> -> vector<128x64xf32>
    %20 = arith.negf %19 : vector<128x64xf32>
    %21 = math.exp %20 : vector<128x64xf32>
    %cst_14 = arith.constant 1.000000e+00 : f32
    %22 = vector.broadcast %cst_14 : f32 to vector<128x64xf32>
    %23 = arith.addf %22, %21 : vector<128x64xf32>
    %24 = arith.divf %22, %23 : vector<128x64xf32>
    %25 = arith.mulf %19, %24 : vector<128x64xf32>
    %cst_15 = arith.constant 1.66666663 : f32
    %26 = vector.broadcast %cst_15 : f32 to vector<128x64xf32>
    %27 = arith.mulf %25, %26 : vector<128x64xf32>
    %28 = arith.truncf %27 : vector<128x64xf32> to vector<128x64xbf16>
    %c0_16 = arith.constant 0 : index
    %c0_17 = arith.constant 0 : index
    %29 = vector.load %arg6[%c0_16, %c0_17] : memref<128x64xbf16, #tpu.memory_space<vmem>>, vector<128x64xbf16>
    tpu.vector_store %arg6[%c0_16, %c0_17], %28 {strides = array<i32>} : memref<128x64xbf16, #tpu.memory_space<vmem>>, vector<128x64xbf16>,
    return
  }
  func.func @transform_0(%arg0: i32) -> (i32, i32) {
    %c0_i32 = arith.constant 0 : i32
    %c0_i32_0 = arith.constant 0 : i32
    return %arg0, %c0_i32 : i32, i32
  }
  func.func @transform_1(%arg0: i32) -> (i32, i32) {
    %c0_i32 = arith.constant 0 : i32
    %c0_i32_0 = arith.constant 0 : i32
    return %arg0, %c0_i32 : i32, i32
  }
  func.func @transform_2(%arg0: i32) -> (i32, i32) {
    %c0_i32 = arith.constant 0 : i32
    %c0_i32_0 = arith.constant 0 : i32
    %c0_i32_1 = arith.constant 0 : i32
    return %c0_i32, %c0_i32_0 : i32, i32
  }
  func.func @transform_3(%arg0: i32) -> (i32, i32) {
    %c0_i32 = arith.constant 0 : i32
    %c0_i32_0 = arith.constant 0 : i32
    %c0_i32_1 = arith.constant 0 : i32
    return %c0_i32, %c0_i32_0 : i32, i32
  }
  func.func @transform_4(%arg0: i32) -> (i32, i32) {
    %c0_i32 = arith.constant 0 : i32
    %c0_i32_0 = arith.constant 0 : i32
    %c0_i32_1 = arith.constant 0 : i32
    return %c0_i32, %c0_i32_0 : i32, i32
  }
  func.func @transform_5(%arg0: i32) -> (i32, i32) {
    %c0_i32 = arith.constant 0 : i32
    %c0_i32_0 = arith.constant 0 : i32
    return %arg0, %c0_i32 : i32, i32
  }
}

</mosaic_0001>

<llo_original>
// kernel: tpu_custom_call.1
$region0: #{tpu_custom_call.1}
  #allocation0 [shape = 'u32[]', space=smem, size = 0x4, offset = 0x4, fixed_abs, tag = 'smem constant byte address 0x4 - core index']
  #allocation1 [shape = 'u32[144,128]{1,0:T(1,128)}', space=vmem, size = 0x12000, scoped, tag = 'internal scratch']
  %s0 = inlined_call_operand.vmem [shape: bf16[512,128], index: 0, kind: input, shape index: {}]
  %s1 = inlined_call_operand.vmem [shape: bf16[512,16], index: 1, kind: input, shape index: {}]
  %s2 = inlined_call_operand.vmem [shape: bf16[128,128], index: 2, kind: input, shape index: {}]
  %s3 = inlined_call_operand.vmem [shape: bf16[16,128], index: 3, kind: input, shape index: {}]
  %s4 = inlined_call_operand.vmem [shape: bf16[128,64], index: 4, kind: input, shape index: {}]
  %s5 = inlined_call_operand.vmem [shape: bf16[512,64], index: 5, kind: output, shape index: {}]
  %s6 = sld [smem:[#allocation0]]
  $region53: #{tpu_custom_call.1} parent=0
    _
  %s8 = ssub.s32 1, %s6
  %s9 = scalar_select 0, %s8, %s6
  loop: start=0, step=1, limit=6
  $region2: #{tpu_custom_call.1} parent=0 // loop_pre_header
    _
  $region3: #{tpu_custom_call.1} parent=0 // loop_header
    %s11 = sphi 0, %s15
    %p12 = scmp.ge.s32.totalorder %s11, 6
    %s21 = sphi 0, %s23
    %s24 = sphi 0, %s21
    %s25 = sphi 0, %s24
    %s41 = sphi 0, %s25
    %s47 = sphi 0, %s49
    %s50 = sphi 0, %s47
    %s51 = sphi 0, %s50
    %s67 = sphi 0, %s51
    %s71 = sphi 0, %s71
    %s73 = sphi 0, %s71
    %s74 = sphi 0, %s73
    %s88 = sphi 0, %s74
    %s92 = sphi 0, %s92
    %s94 = sphi 0, %s92
    %s95 = sphi 0, %s94
    %s109 = sphi 0, %s95
    %s113 = sphi 0, %s113
    %s115 = sphi 0, %s113
    %s116 = sphi 0, %s115
    %s130 = sphi 0, %s116
    %s136 = sphi 0, %s138
    %s139 = sphi 0, %s136
    %s140 = sphi 0, %s139
    %s156 = sphi 0, %s140
  $region4: #{tpu_custom_call.1} parent=0 // loop_header_branch
    %14 = sbr.rel (%p12) target = $region8
  $region5: #{tpu_custom_call.1} parent=0 // loop_body
    %s16 = ssub.s32 %s11, 1
    %s17 = ssub.s32 %s11, 2
    %s18 = sadd.s32 %s11, 1
    %s19 = ssub.s32 %s11, %s18
    %p20 = scmp.eq.s32.totalorder %s19, 0
    %s22 = sadd.s32 %s21, 1
    %s23 = scalar_select %p20, %s21, %s22
    %p26 = pneg %p20
    %p27 = scmp.eq.s32.totalorder %s11, 3
    %p28 = por %p26, %p27
    %p29 = scmp.ne.s32.totalorder %s21, %s24
    %p30 = scmp.eq.s32.totalorder %s11, 0
    %p31 = por %p29, %p30
    %p32 = scmp.ne.s32.totalorder %s21, %s24
    %p33 = scmp.eq.s32.totalorder %s16, 3
    %p34 = por %p32, %p33
    %p35 = scmp.ne.s32.totalorder %s24, %s25
    %p36 = scmp.eq.s32.totalorder %s16, 0
    %p37 = por %p35, %p36
    %p38 = scmp.ne.s32.totalorder %s24, %s25
    %p39 = scmp.eq.s32.totalorder %s17, 3
    %p40 = por %p38, %p39
    %p42 = scmp.ne.s32.totalorder %s25, %s41
    %p43 = scmp.eq.s32.totalorder %s17, 0
    %p44 = por %p42, %p43
    %s45 = ssub.s32 %s11, %s18
    %p46 = scmp.eq.s32.totalorder %s45, 0
    %s48 = sadd.s32 %s47, 1
    %s49 = scalar_select %p46, %s47, %s48
    %p52 = pneg %p46
    %p53 = scmp.eq.s32.totalorder %s11, 3
    %p54 = por %p52, %p53
    %p55 = scmp.ne.s32.totalorder %s47, %s50
    %p56 = scmp.eq.s32.totalorder %s11, 0
    %p57 = por %p55, %p56
    %p58 = scmp.ne.s32.totalorder %s47, %s50
    %p59 = scmp.eq.s32.totalorder %s16, 3
    %p60 = por %p58, %p59
    %p61 = scmp.ne.s32.totalorder %s50, %s51
    %p62 = scmp.eq.s32.totalorder %s16, 0
    %p63 = por %p61, %p62
    %p64 = scmp.ne.s32.totalorder %s50, %s51
    %p65 = scmp.eq.s32.totalorder %s17, 3
    %p66 = por %p64, %p65
    %p68 = scmp.ne.s32.totalorder %s51, %s67
    %p69 = scmp.eq.s32.totalorder %s17, 0
    %p70 = por %p68, %p69
    %s72 = sadd.s32 %s71, 1
    %p75 = scmp.eq.s32.totalorder %s11, 3
    %p76 = scmp.ne.s32.totalorder %s71, %s73
    %p77 = scmp.eq.s32.totalorder %s11, 0
    %p78 = por %p76, %p77
    %p79 = scmp.ne.s32.totalorder %s71, %s73
    %p80 = scmp.eq.s32.totalorder %s16, 3
    %p81 = por %p79, %p80
    %p82 = scmp.ne.s32.totalorder %s73, %s74
    %p83 = scmp.eq.s32.totalorder %s16, 0
    %p84 = por %p82, %p83
    %p85 = scmp.ne.s32.totalorder %s73, %s74
    %p86 = scmp.eq.s32.totalorder %s17, 3
    %p87 = por %p85, %p86
    %p89 = scmp.ne.s32.totalorder %s74, %s88
    %p90 = scmp.eq.s32.totalorder %s17, 0
    %p91 = por %p89, %p90
    %s93 = sadd.s32 %s92, 1
    %p96 = scmp.eq.s32.totalorder %s11, 3
    %p97 = scmp.ne.s32.totalorder %s92, %s94
    %p98 = scmp.eq.s32.totalorder %s11, 0
    %p99 = por %p97, %p98
    %p100 = scmp.ne.s32.totalorder %s92, %s94
    %p101 = scmp.eq.s32.totalorder %s16, 3
    %p102 = por %p100, %p101
    %p103 = scmp.ne.s32.totalorder %s94, %s95
    %p104 = scmp.eq.s32.totalorder %s16, 0
    %p105 = por %p103, %p104
    %p106 = scmp.ne.s32.totalorder %s94, %s95
    %p107 = scmp.eq.s32.totalorder %s17, 3
    %p108 = por %p106, %p107
    %p110 = scmp.ne.s32.totalorder %s95, %s109
    %p111 = scmp.eq.s32.totalorder %s17, 0
    %p112 = por %p110, %p111
    %s114 = sadd.s32 %s113, 1
    %p117 = scmp.eq.s32.totalorder %s11, 3
    %p118 = scmp.ne.s32.totalorder %s113, %s115
    %p119 = scmp.eq.s32.totalorder %s11, 0
    %p120 = por %p118, %p119
    %p121 = scmp.ne.s32.totalorder %s113, %s115
    %p122 = scmp.eq.s32.totalorder %s16, 3
    %p123 = por %p121, %p122
    %p124 = scmp.ne.s32.totalorder %s115, %s116
    %p125 = scmp.eq.s32.totalorder %s16, 0
    %p126 = por %p124, %p125
    %p127 = scmp.ne.s32.totalorder %s115, %s116
    %p128 = scmp.eq.s32.totalorder %s17, 3
    %p129 = por %p127, %p128
    %p131 = scmp.ne.s32.totalorder %s116, %s130
    %p132 = scmp.eq.s32.totalorder %s17, 0
    %p133 = por %p131, %p132
    %s134 = ssub.s32 %s11, %s18
    %p135 = scmp.eq.s32.totalorder %s134, 0
    %s137 = sadd.s32 %s136, 1
    %s138 = scalar_select %p135, %s136, %s137
    %p141 = pneg %p135
    %p142 = scmp.eq.s32.totalorder %s11, 3
    %p143 = por %p141, %p142
    %p144 = scmp.ne.s32.totalorder %s136, %s139
    %p145 = scmp.eq.s32.totalorder %s11, 0
    %p146 = por %p144, %p145
    %p147 = scmp.ne.s32.totalorder %s136, %s139
    %p148 = scmp.eq.s32.totalorder %s16, 3
    %p149 = por %p147, %p148
    %p150 = scmp.ne.s32.totalorder %s139, %s140
    %p151 = scmp.eq.s32.totalorder %s16, 0
    %p152 = por %p150, %p151
    %p153 = scmp.ne.s32.totalorder %s139, %s140
    %p154 = scmp.eq.s32.totalorder %s17, 3
    %p155 = por %p153, %p154
    %p157 = scmp.ne.s32.totalorder %s140, %s156
    %p158 = scmp.eq.s32.totalorder %s17, 0
    %p159 = por %p157, %p158
    %p160 = scmp.le.s32.totalorder 1, %s11
    %p161 = scmp.lt.s32.totalorder %s11, 5
    %p162 = pnand %p160, %p161
    %p163 = pneg %p162
    // Predicated region
    $region9: #{tpu_custom_call.1} parent=5 // pred_check
      _
    $region10: #{tpu_custom_call.1} parent=5 // pred_check_branch
      %165 = sbr.rel (%p162) target = $region12
    $region11: #{tpu_custom_call.1} parent=5 // pred_region
      %s166 = ssub.s32 %s11, 1
      // Predicated region
      $region13: #{tpu_custom_call.1} parent=11 // pred_check
        %p167 = pneg %p84
      $region14: #{tpu_custom_call.1} parent=11 // pred_check_branch
        %169 = sbr.rel (%p167) target = $region16
      $region15: #{tpu_custom_call.1} parent=11 // pred_region
        _
      $region16: #{tpu_custom_call.1} parent=11 // pred_fallthru
        _
      // Predicated region
      $region17: #{tpu_custom_call.1} parent=11 // pred_check
        %p170 = pneg %p105
      $region18: #{tpu_custom_call.1} parent=11 // pred_check_branch
        %172 = sbr.rel (%p170) target = $region20
      $region19: #{tpu_custom_call.1} parent=11 // pred_region
        _
      $region20: #{tpu_custom_call.1} parent=11 // pred_fallthru
        _
      // Predicated region
      $region21: #{tpu_custom_call.1} parent=11 // pred_check
        %p173 = pneg %p126
      $region22: #{tpu_custom_call.1} parent=11 // pred_check_branch
        %175 = sbr.rel (%p173) target = $region24
      $region23: #{tpu_custom_call.1} parent=11 // pred_region
        _
      $region24: #{tpu_custom_call.1} parent=11 // pred_fallthru
        _
    $region12: #{tpu_custom_call.1} parent=5 // pred_fallthru
      _
    %p176 = scmp.lt.s32.totalorder %s11, 4
    // Predicated region
    $region25: #{tpu_custom_call.1} parent=5 // pred_check
      %p177 = pneg %p176
    $region26: #{tpu_custom_call.1} parent=5 // pred_check_branch
      %179 = sbr.rel (%p177) target = $region28
    $region27: #{tpu_custom_call.1} parent=5 // pred_region
      // Predicated region
      $region29: #{tpu_custom_call.1} parent=27 // pred_check
        %p180 = pneg %p31
      $region30: #{tpu_custom_call.1} parent=27 // pred_check_branch
        %182 = sbr.rel (%p180) target = $region32
      $region31: #{tpu_custom_call.1} parent=27 // pred_region
        %s183 = smul.u32 16, %s11
        %p184 = scmp.lt.s32.totalorder %s183, 63
        %s185 = scalar_select %p184, %s183, 63
        %s186 = smul.addr %s185, 4
        %s187 = scalar_lea.vmem %s0, %s186
        %s188 = smul.u32 16, %s11
      $region32: #{tpu_custom_call.1} parent=27 // pred_fallthru
        _
      // Predicated region
      $region33: #{tpu_custom_call.1} parent=27 // pred_check
        %p189 = pneg %p57
      $region34: #{tpu_custom_call.1} parent=27 // pred_check_branch
        %191 = sbr.rel (%p189) target = $region36
      $region35: #{tpu_custom_call.1} parent=27 // pred_region
        %s192 = smul.u32 16, %s11
        %p193 = scmp.lt.s32.totalorder %s192, 63
        %s194 = scalar_select %p193, %s192, 63
        %s195 = smul.addr %s194, 4
        %s196 = scalar_lea.vmem %s1, %s195
        %s197 = smul.u32 16, %s11
      $region36: #{tpu_custom_call.1} parent=27 // pred_fallthru
        _
    $region28: #{tpu_custom_call.1} parent=5 // pred_fallthru
      _
    %p198 = scmp.le.s32.totalorder 1, %s11
    %p199 = scmp.lt.s32.totalorder %s11, 5
    %p200 = pnand %p198, %p199
    %p201 = pneg %p200
    // Predicated region
    $region37: #{tpu_custom_call.1} parent=5 // pred_check
      _
    $region38: #{tpu_custom_call.1} parent=5 // pred_check_branch
      %203 = sbr.rel (%p200) target = $region40
    $region39: #{tpu_custom_call.1} parent=5 // pred_region
      %s204 = ssub.s32 %s11, 1
      %s205 = smul.u32 16, %s16
      %p206 = scmp.lt.s32.totalorder %s205, 63
      %s207 = scalar_select %p206, %s205, 63
      %s208 = smul.addr %s207, 4
      %s209 = scalar_lea.vmem %s0, %s208
      %p210 = pneg %p37
      %p211 = pneg %p34
      %s212 = smul.u32 16, %s16
      %p213 = scmp.lt.s32.totalorder %s212, 63
      %s214 = scalar_select %p213, %s212, 63
      %s215 = smul.addr %s214, 4
      %s216 = scalar_lea.vmem %s1, %s215
      %p217 = pneg %p63
      %p218 = pneg %p60
      %p219 = pneg %p84
      %p220 = pneg %p81
      %p221 = pneg %p105
      %p222 = pneg %p102
      %p223 = pneg %p126
      %p224 = pneg %p123
      %p225 = pneg %p152
      %p226 = pneg %p149
      %s227 = smul.u32 16, %s16
      %p228 = scmp.lt.s32.totalorder %s227, 63
      %s229 = scalar_select %p228, %s227, 63
      %s230 = smul.addr %s229, 4
      %s231 = scalar_lea.vmem %s5, %s230
      %s232 = smul.u32 16, %s16
      %p233 = scmp.lt.s32.totalorder %s232, 63
      %s234 = scalar_select %p233, %s232, 63
      %s235 = smul.addr %s234, 4
      %s236 = scalar_lea.vmem %s0, %s235
      %s237 = smul.u32 16, %s16
      %s238 = smul.u32 16, %s16
      %p239 = scmp.lt.s32.totalorder %s238, 63
      %s240 = scalar_select %p239, %s238, 63
      %s241 = smul.addr %s240, 4
      %s242 = scalar_lea.vmem %s1, %s241
      %s243 = smul.u32 16, %s16
      %s244 = smul.u32 16, %s16
      %p245 = scmp.lt.s32.totalorder %s244, 63
      %s246 = scalar_select %p245, %s244, 63
      %s247 = smul.addr %s246, 4
      %s248 = scalar_lea.vmem %s5, %s247
      %s249 = smul.u32 16, %s16
      %v251 = vld [vmem:[%s236] sm:$0xf]
      %v252 = vld [vmem:[%s236 + $0x4] sm:$0xf]
      %v253 = vld [vmem:[%s236 + $0x8] sm:$0xf]
      %v254 = vld [vmem:[%s236 + $0xc] sm:$0xf]
      %v255 = vld [vmem:[%s236 + $0x10] sm:$0xf]
      %v256 = vld [vmem:[%s236 + $0x14] sm:$0xf]
      %v257 = vld [vmem:[%s236 + $0x18] sm:$0xf]
      %v258 = vld [vmem:[%s236 + $0x1c] sm:$0xf]
      %v259 = vld [vmem:[%s236 + $0x20] sm:$0xf]
      %v260 = vld [vmem:[%s236 + $0x24] sm:$0xf]
      %v261 = vld [vmem:[%s236 + $0x28] sm:$0xf]
      %v262 = vld [vmem:[%s236 + $0x2c] sm:$0xf]
      %v263 = vld [vmem:[%s236 + $0x30] sm:$0xf]
      %v264 = vld [vmem:[%s236 + $0x34] sm:$0xf]
      %v265 = vld [vmem:[%s236 + $0x38] sm:$0xf]
      %v266 = vld [vmem:[%s236 + $0x3c] sm:$0xf]
      %v267 = vld [vmem:[%s2] sm:$0xf]
      %v268 = vld [vmem:[%s2 + $0x4] sm:$0xf]
      %v269 = vld [vmem:[%s2 + $0x8] sm:$0xf]
      %v270 = vld [vmem:[%s2 + $0xc] sm:$0xf]
      %v271 = vld [vmem:[%s2 + $0x10] sm:$0xf]
      %v272 = vld [vmem:[%s2 + $0x14] sm:$0xf]
      %v273 = vld [vmem:[%s2 + $0x18] sm:$0xf]
      %v274 = vld [vmem:[%s2 + $0x1c] sm:$0xf]
      %v275 = vld [vmem:[%s2 + $0x20] sm:$0xf]
      %v276 = vld [vmem:[%s2 + $0x24] sm:$0xf]
      %v277 = vld [vmem:[%s2 + $0x28] sm:$0xf]
      %v278 = vld [vmem:[%s2 + $0x2c] sm:$0xf]
      %v279 = vld [vmem:[%s2 + $0x30] sm:$0xf]
      %v280 = vld [vmem:[%s2 + $0x34] sm:$0xf]
      %v281 = vld [vmem:[%s2 + $0x38] sm:$0xf]
      %v282 = vld [vmem:[%s2 + $0x3c] sm:$0xf]
      %v299 = vunpack.c.l.b16 %v251
      %v300 = vunpack.c.l.b16 %v252
      %v301 = vunpack.c.l.b16 %v253
      %v302 = vunpack.c.l.b16 %v254
      %v303 = vunpack.c.l.b16 %v255
      %v304 = vunpack.c.l.b16 %v256
      %v305 = vunpack.c.l.b16 %v257
      %v306 = vunpack.c.l.b16 %v258
      %v307 = vunpack.c.l.b16 %v259
      %v308 = vunpack.c.l.b16 %v260
      %v309 = vunpack.c.l.b16 %v261
      %v310 = vunpack.c.l.b16 %v262
      %v311 = vunpack.c.l.b16 %v263
      %v312 = vunpack.c.l.b16 %v264
      %v313 = vunpack.c.l.b16 %v265
      %v314 = vunpack.c.l.b16 %v266
      %v315 = vpack.c.b16 %v300, %v299
      %v316 = vpack.c.b16 %v302, %v301
      %v317 = vpack.c.b16 %v304, %v303
      %v318 = vpack.c.b16 %v306, %v305
      %v319 = vpack.c.b16 %v308, %v307
      %v320 = vpack.c.b16 %v310, %v309
      %v321 = vpack.c.b16 %v312, %v311
      %v322 = vpack.c.b16 %v314, %v313
      %v347 = vunpack.c.l.b16 %v267
      %v348 = vunpack.c.l.b16 %v268
      %v349 = vunpack.c.l.b16 %v269
      %v350 = vunpack.c.l.b16 %v270
      %v351 = vunpack.c.l.b16 %v271
      %v352 = vunpack.c.l.b16 %v272
      %v353 = vunpack.c.l.b16 %v273
      %v354 = vunpack.c.l.b16 %v274
      %v355 = vunpack.c.l.b16 %v275
      %v356 = vunpack.c.l.b16 %v276
      %v357 = vunpack.c.l.b16 %v277
      %v358 = vunpack.c.l.b16 %v278
      %v359 = vunpack.c.l.b16 %v279
      %v360 = vunpack.c.l.b16 %v280
      %v361 = vunpack.c.l.b16 %v281
      %v362 = vunpack.c.l.b16 %v282
      %v363 = vpack.c.b16 %v348, %v347
      %v364 = vpack.c.b16 %v350, %v349
      %v365 = vpack.c.b16 %v352, %v351
      %v366 = vpack.c.b16 %v354, %v353
      %v367 = vpack.c.b16 %v356, %v355
      %v368 = vpack.c.b16 %v358, %v357
      %v369 = vpack.c.b16 %v360, %v359
      %v370 = vpack.c.b16 %v362, %v361
      %379 = vmatprep.subr.bf16.mxu0 0
      %380 = vmatpush1.bf16.msra.mxu0 %v370
      %381 = vmatprep.subr.bf16.mxu0 0
      %382 = vmatpush1.bf16.msra.mxu0 %v369
      %383 = vmatprep.subr.bf16.mxu0 0
      %384 = vmatpush1.bf16.msra.mxu0 %v368
      %385 = vmatprep.subr.bf16.mxu0 0
      %386 = vmatpush1.bf16.msra.mxu0 %v367
      %387 = vmatprep.subr.bf16.mxu0 0
      %388 = vmatpush1.bf16.msra.mxu0 %v366
      %389 = vmatprep.subr.bf16.mxu0 0
      %390 = vmatpush1.bf16.msra.mxu0 %v365
      %391 = vmatprep.subr.bf16.mxu0 0
      %392 = vmatpush1.bf16.msra.mxu0 %v364
      %393 = vmatprep.subr.bf16.mxu0 0
      %394 = vmatpush1.bf16.msra.mxu0 %v363
      %395 = vmatprep.subr.bf16.mxu0 0
      %396 = vmatpush2.bf16.msra.mxu0 0
      %397 = vmatprep.subr.bf16.mxu0 0
      %398 = vmatpush2.bf16.msra.mxu0 0
      %399 = vmatprep.subr.bf16.mxu0 0
      %400 = vmatpush2.bf16.msra.mxu0 0
      %401 = vmatprep.subr.bf16.mxu0 0
      %402 = vmatpush2.bf16.msra.mxu0 0
      %403 = vmatprep.subr.bf16.mxu0 0
      %404 = vmatpush2.bf16.msra.mxu0 0
      %405 = vmatprep.subr.bf16.mxu0 0
      %406 = vmatpush2.bf16.msra.mxu0 0
      %407 = vmatprep.subr.bf16.mxu0 0
      %408 = vmatpush2.bf16.msra.mxu0 0
      %409 = vmatprep.subr.bf16.mxu0 0
      %410 = vmatpush2.bf16.msra.mxu0 0
      %411 = vmatprep.mubr.bf16.mxu0 0
      %412 = vmatmul.mubr.bf16.gmra.mxu0 %v315
      %v413 = vpop.f32.mrf.mxu0
      %v414 = vadd.f32 0.0, %v413
      %v415 = vpop.f32.mrf.mxu0
      %v416 = vpop.f32.mrf.mxu0
      %v417 = vadd.f32 0.0, %v416
      %v418 = vpop.f32.mrf.mxu0
      %419 = vmatprep.mubr.bf16.mxu0 0
      %420 = vmatmul.mubr.bf16.gmra.mxu0 %v316
      %v421 = vpop.f32.mrf.mxu0
      %v422 = vadd.f32 0.0, %v421
      %v423 = vpop.f32.mrf.mxu0
      %v424 = vpop.f32.mrf.mxu0
      %v425 = vadd.f32 0.0, %v424
      %v426 = vpop.f32.mrf.mxu0
      %427 = vmatprep.mubr.bf16.mxu0 0
      %428 = vmatmul.mubr.bf16.gmra.mxu0 %v317
      %v429 = vpop.f32.mrf.mxu0
      %v430 = vadd.f32 0.0, %v429
      %v431 = vpop.f32.mrf.mxu0
      %v432 = vpop.f32.mrf.mxu0
      %v433 = vadd.f32 0.0, %v432
      %v434 = vpop.f32.mrf.mxu0
      %435 = vmatprep.mubr.bf16.mxu0 0
      %436 = vmatmul.mubr.bf16.gmra.mxu0 %v318
      %v437 = vpop.f32.mrf.mxu0
      %v438 = vadd.f32 0.0, %v437
      %v439 = vpop.f32.mrf.mxu0
      %v440 = vpop.f32.mrf.mxu0
      %v441 = vadd.f32 0.0, %v440
      %v442 = vpop.f32.mrf.mxu0
      %443 = vmatprep.mubr.bf16.mxu0 0
      %444 = vmatmul.mubr.bf16.gmra.mxu0 %v319
      %v445 = vpop.f32.mrf.mxu0
      %v446 = vadd.f32 0.0, %v445
      %v447 = vpop.f32.mrf.mxu0
      %v448 = vpop.f32.mrf.mxu0
      %v449 = vadd.f32 0.0, %v448
      %v450 = vpop.f32.mrf.mxu0
      %451 = vmatprep.mubr.bf16.mxu0 0
      %452 = vmatmul.mubr.bf16.gmra.mxu0 %v320
      %v453 = vpop.f32.mrf.mxu0
      %v454 = vadd.f32 0.0, %v453
      %v455 = vpop.f32.mrf.mxu0
      %v456 = vpop.f32.mrf.mxu0
      %v457 = vadd.f32 0.0, %v456
      %v458 = vpop.f32.mrf.mxu0
      %459 = vmatprep.mubr.bf16.mxu0 0
      %460 = vmatmul.mubr.bf16.gmra.mxu0 %v321
      %v461 = vpop.f32.mrf.mxu0
      %v462 = vadd.f32 0.0, %v461
      %v463 = vpop.f32.mrf.mxu0
      %v464 = vpop.f32.mrf.mxu0
      %v465 = vadd.f32 0.0, %v464
      %v466 = vpop.f32.mrf.mxu0
      %467 = vmatprep.mubr.bf16.mxu0 0
      %468 = vmatmul.mubr.bf16.gmra.mxu0 %v322
      %v469 = vpop.f32.mrf.mxu0
      %v470 = vadd.f32 0.0, %v469
      %v471 = vpop.f32.mrf.mxu0
      %v472 = vpop.f32.mrf.mxu0
      %v473 = vadd.f32 0.0, %v472
      %v474 = vpop.f32.mrf.mxu0
      %475 = vdwg.mxu0
      %v476 = vxor.u32 %v414, 2147483648
      %v477 = vxor.u32 %v417, 2147483648
      %v478 = vxor.u32 %v422, 2147483648
      %v479 = vxor.u32 %v425, 2147483648
      %v480 = vxor.u32 %v430, 2147483648
      %v481 = vxor.u32 %v433, 2147483648
      %v482 = vxor.u32 %v438, 2147483648
      %v483 = vxor.u32 %v441, 2147483648
      %v484 = vxor.u32 %v446, 2147483648
      %v485 = vxor.u32 %v449, 2147483648
      %v486 = vxor.u32 %v454, 2147483648
      %v487 = vxor.u32 %v457, 2147483648
      %v488 = vxor.u32 %v462, 2147483648
      %v489 = vxor.u32 %v465, 2147483648
      %v490 = vxor.u32 %v470, 2147483648
      %v491 = vxor.u32 %v473, 2147483648
      %v492 = vmul.f32 %v476, 1.442695
      %v493 = vpow.pop %v492
      %v494 = vmul.f32 %v477, 1.442695
      %v495 = vpow.pop %v494
      %v496 = vmul.f32 %v478, 1.442695
      %v497 = vpow.pop %v496
      %v498 = vmul.f32 %v479, 1.442695
      %v499 = vpow.pop %v498
      %v500 = vmul.f32 %v480, 1.442695
      %v501 = vpow.pop %v500
      %v502 = vmul.f32 %v481, 1.442695
      %v503 = vpow.pop %v502
      %v504 = vmul.f32 %v482, 1.442695
      %v505 = vpow.pop %v504
      %v506 = vmul.f32 %v483, 1.442695
      %v507 = vpow.pop %v506
      %v508 = vmul.f32 %v484, 1.442695
      %v509 = vpow.pop %v508
      %v510 = vmul.f32 %v485, 1.442695
      %v511 = vpow.pop %v510
      %v512 = vmul.f32 %v486, 1.442695
      %v513 = vpow.pop %v512
      %v514 = vmul.f32 %v487, 1.442695
      %v515 = vpow.pop %v514
      %v516 = vmul.f32 %v488, 1.442695
      %v517 = vpow.pop %v516
      %v518 = vmul.f32 %v489, 1.442695
      %v519 = vpow.pop %v518
      %v520 = vmul.f32 %v490, 1.442695
      %v521 = vpow.pop %v520
      %v522 = vmul.f32 %v491, 1.442695
      %v523 = vpow.pop %v522
      %v524 = vadd.f32 %v493, 1.0
      %v525 = vadd.f32 %v495, 1.0
      %v526 = vadd.f32 %v497, 1.0
      %v527 = vadd.f32 %v499, 1.0
      %v528 = vadd.f32 %v501, 1.0
      %v529 = vadd.f32 %v503, 1.0
      %v530 = vadd.f32 %v505, 1.0
      %v531 = vadd.f32 %v507, 1.0
      %v532 = vadd.f32 %v509, 1.0
      %v533 = vadd.f32 %v511, 1.0
      %v534 = vadd.f32 %v513, 1.0
      %v535 = vadd.f32 %v515, 1.0
      %v536 = vadd.f32 %v517, 1.0
      %v537 = vadd.f32 %v519, 1.0
      %v538 = vadd.f32 %v521, 1.0
      %v539 = vadd.f32 %v523, 1.0
      %v540 = vrcp.pop %v524
      %v541 = vmul.f32 1.0, %v540
      %v542 = vrcp.pop %v525
      %v543 = vmul.f32 1.0, %v542
      %v544 = vrcp.pop %v526
      %v545 = vmul.f32 1.0, %v544
      %v546 = vrcp.pop %v527
      %v547 = vmul.f32 1.0, %v546
      %v548 = vrcp.pop %v528
      %v549 = vmul.f32 1.0, %v548
      %v550 = vrcp.pop %v529
      %v551 = vmul.f32 1.0, %v550
      %v552 = vrcp.pop %v530
      %v553 = vmul.f32 1.0, %v552
      %v554 = vrcp.pop %v531
      %v555 = vmul.f32 1.0, %v554
      %v556 = vrcp.pop %v532
      %v557 = vmul.f32 1.0, %v556
      %v558 = vrcp.pop %v533
      %v559 = vmul.f32 1.0, %v558
      %v560 = vrcp.pop %v534
      %v561 = vmul.f32 1.0, %v560
      %v562 = vrcp.pop %v535
      %v563 = vmul.f32 1.0, %v562
      %v564 = vrcp.pop %v536
      %v565 = vmul.f32 1.0, %v564
      %v566 = vrcp.pop %v537
      %v567 = vmul.f32 1.0, %v566
      %v568 = vrcp.pop %v538
      %v569 = vmul.f32 1.0, %v568
      %v570 = vrcp.pop %v539
      %v571 = vmul.f32 1.0, %v570
      %v572 = vmul.f32 %v414, %v541
      %v573 = vmul.f32 %v417, %v543
      %v574 = vmul.f32 %v422, %v545
      %v575 = vmul.f32 %v425, %v547
      %v576 = vmul.f32 %v430, %v549
      %v577 = vmul.f32 %v433, %v551
      %v578 = vmul.f32 %v438, %v553
      %v579 = vmul.f32 %v441, %v555
      %v580 = vmul.f32 %v446, %v557
      %v581 = vmul.f32 %v449, %v559
      %v582 = vmul.f32 %v454, %v561
      %v583 = vmul.f32 %v457, %v563
      %v584 = vmul.f32 %v462, %v565
      %v585 = vmul.f32 %v465, %v567
      %v586 = vmul.f32 %v470, %v569
      %v587 = vmul.f32 %v473, %v571
      %v588 = vmul.f32 %v572, 1.6666666
      %v589 = vmul.f32 %v573, 1.6666666
      %v590 = vmul.f32 %v574, 1.6666666
      %v591 = vmul.f32 %v575, 1.6666666
      %v592 = vmul.f32 %v576, 1.6666666
      %v593 = vmul.f32 %v577, 1.6666666
      %v594 = vmul.f32 %v578, 1.6666666
      %v595 = vmul.f32 %v579, 1.6666666
      %v596 = vmul.f32 %v580, 1.6666666
      %v597 = vmul.f32 %v581, 1.6666666
      %v598 = vmul.f32 %v582, 1.6666666
      %v599 = vmul.f32 %v583, 1.6666666
      %v600 = vmul.f32 %v584, 1.6666666
      %v601 = vmul.f32 %v585, 1.6666666
      %v602 = vmul.f32 %v586, 1.6666666
      %v603 = vmul.f32 %v587, 1.6666666
      %v604 = vld [vmem:[%s242] sm:$0xf]
      %v605 = vld [vmem:[%s242 + $0x4] sm:$0xf]
      %v606 = vld [vmem:[%s242 + $0x8] sm:$0xf]
      %v607 = vld [vmem:[%s242 + $0xc] sm:$0xf]
      %v608 = vld [vmem:[%s242 + $0x10] sm:$0xf]
      %v609 = vld [vmem:[%s242 + $0x14] sm:$0xf]
      %v610 = vld [vmem:[%s242 + $0x18] sm:$0xf]
      %v611 = vld [vmem:[%s242 + $0x1c] sm:$0xf]
      %v612 = vld [vmem:[%s242 + $0x20] sm:$0xf]
      %v613 = vld [vmem:[%s242 + $0x24] sm:$0xf]
      %v614 = vld [vmem:[%s242 + $0x28] sm:$0xf]
      %v615 = vld [vmem:[%s242 + $0x2c] sm:$0xf]
      %v616 = vld [vmem:[%s242 + $0x30] sm:$0xf]
      %v617 = vld [vmem:[%s242 + $0x34] sm:$0xf]
      %v618 = vld [vmem:[%s242 + $0x38] sm:$0xf]
      %v619 = vld [vmem:[%s242 + $0x3c] sm:$0xf]
      %v620 = vld [vmem:[%s3] sm:$0xf]
      %v621 = vld [vmem:[%s3 + $0x4] sm:$0xf]
      %v638 = vunpack.c.l.b16 %v604
      %v639 = vunpack.c.l.b16 %v605
      %v640 = vunpack.c.l.b16 %v606
      %v641 = vunpack.c.l.b16 %v607
      %v642 = vunpack.c.l.b16 %v608
      %v643 = vunpack.c.l.b16 %v609
      %v644 = vunpack.c.l.b16 %v610
      %v645 = vunpack.c.l.b16 %v611
      %v646 = vunpack.c.l.b16 %v612
      %v647 = vunpack.c.l.b16 %v613
      %v648 = vunpack.c.l.b16 %v614
      %v649 = vunpack.c.l.b16 %v615
      %v650 = vunpack.c.l.b16 %v616
      %v651 = vunpack.c.l.b16 %v617
      %v652 = vunpack.c.l.b16 %v618
      %v653 = vunpack.c.l.b16 %v619
      %v654 = vpack.c.b16 %v639, %v638
      %v655 = vpack.c.b16 %v641, %v640
      %v656 = vpack.c.b16 %v643, %v642
      %v657 = vpack.c.b16 %v645, %v644
      %v658 = vpack.c.b16 %v647, %v646
      %v659 = vpack.c.b16 %v649, %v648
      %v660 = vpack.c.b16 %v651, %v650
      %v661 = vpack.c.b16 %v653, %v652
      %v664 = vunpack.c.l.b16 %v620
      %v665 = vunpack.c.l.b16 %v621
      %v666 = vpack.c.b16 %v665, %v664
      %vm668 = vcmask 130048
      %v670 = vsel %vm668, %v654, 0
      %v673 = vsel %vm668, %v655, 0
      %v676 = vsel %vm668, %v656, 0
      %v679 = vsel %vm668, %v657, 0
      %v682 = vsel %vm668, %v658, 0
      %v685 = vsel %vm668, %v659, 0
      %v688 = vsel %vm668, %v660, 0
      %v691 = vsel %vm668, %v661, 0
      %693 = vmatprep.subr.bf16.mxu0 0
      %694 = vmatpush1.bf16.msra.mxu0 0
      %695 = vmatprep.subr.bf16.mxu0 0
      %696 = vmatpush1.bf16.msra.mxu0 0
      %697 = vmatprep.subr.bf16.mxu0 0
      %698 = vmatpush1.bf16.msra.mxu0 0
      %699 = vmatprep.subr.bf16.mxu0 0
      %700 = vmatpush1.bf16.msra.mxu0 0
      %701 = vmatprep.subr.bf16.mxu0 0
      %702 = vmatpush1.bf16.msra.mxu0 0
      %703 = vmatprep.subr.bf16.mxu0 0
      %704 = vmatpush1.bf16.msra.mxu0 0
      %705 = vmatprep.subr.bf16.mxu0 0
      %706 = vmatpush1.bf16.msra.mxu0 0
      %707 = vmatprep.subr.bf16.mxu0 0
      %708 = vmatpush1.bf16.msra.mxu0 %v666
      %709 = vmatprep.subr.bf16.mxu0 0
      %710 = vmatpush2.bf16.msra.mxu0 0
      %711 = vmatprep.subr.bf16.mxu0 0
      %712 = vmatpush2.bf16.msra.mxu0 0
      %713 = vmatprep.subr.bf16.mxu0 0
      %714 = vmatpush2.bf16.msra.mxu0 0
      %715 = vmatprep.subr.bf16.mxu0 0
      %716 = vmatpush2.bf16.msra.mxu0 0
      %717 = vmatprep.subr.bf16.mxu0 0
      %718 = vmatpush2.bf16.msra.mxu0 0
      %719 = vmatprep.subr.bf16.mxu0 0
      %720 = vmatpush2.bf16.msra.mxu0 0
      %721 = vmatprep.subr.bf16.mxu0 0
      %722 = vmatpush2.bf16.msra.mxu0 0
      %723 = vmatprep.subr.bf16.mxu0 0
      %724 = vmatpush2.bf16.msra.mxu0 0
      %725 = vmatprep.mubr.bf16.mxu0 0
      %726 = vmatmul.mubr.bf16.gmra.mxu0 %v670
      %v727 = vpop.f32.mrf.mxu0
      %v728 = vadd.f32 0.0, %v727
      %v729 = vpop.f32.mrf.mxu0
      %v730 = vpop.f32.mrf.mxu0
      %v731 = vadd.f32 0.0, %v730
      %v732 = vpop.f32.mrf.mxu0
      %733 = vmatprep.mubr.bf16.mxu0 0
      %734 = vmatmul.mubr.bf16.gmra.mxu0 %v673
      %v735 = vpop.f32.mrf.mxu0
      %v736 = vadd.f32 0.0, %v735
      %v737 = vpop.f32.mrf.mxu0
      %v738 = vpop.f32.mrf.mxu0
      %v739 = vadd.f32 0.0, %v738
      %v740 = vpop.f32.mrf.mxu0
      %741 = vmatprep.mubr.bf16.mxu0 0
      %742 = vmatmul.mubr.bf16.gmra.mxu0 %v676
      %v743 = vpop.f32.mrf.mxu0
      %v744 = vadd.f32 0.0, %v743
      %v745 = vpop.f32.mrf.mxu0
      %v746 = vpop.f32.mrf.mxu0
      %v747 = vadd.f32 0.0, %v746
      %v748 = vpop.f32.mrf.mxu0
      %749 = vmatprep.mubr.bf16.mxu0 0
      %750 = vmatmul.mubr.bf16.gmra.mxu0 %v679
      %v751 = vpop.f32.mrf.mxu0
      %v752 = vadd.f32 0.0, %v751
      %v753 = vpop.f32.mrf.mxu0
      %v754 = vpop.f32.mrf.mxu0
      %v755 = vadd.f32 0.0, %v754
      %v756 = vpop.f32.mrf.mxu0
      %757 = vmatprep.mubr.bf16.mxu0 0
      %758 = vmatmul.mubr.bf16.gmra.mxu0 %v682
      %v759 = vpop.f32.mrf.mxu0
      %v760 = vadd.f32 0.0, %v759
      %v761 = vpop.f32.mrf.mxu0
      %v762 = vpop.f32.mrf.mxu0
      %v763 = vadd.f32 0.0, %v762
      %v764 = vpop.f32.mrf.mxu0
      %765 = vmatprep.mubr.bf16.mxu0 0
      %766 = vmatmul.mubr.bf16.gmra.mxu0 %v685
      %v767 = vpop.f32.mrf.mxu0
      %v768 = vadd.f32 0.0, %v767
      %v769 = vpop.f32.mrf.mxu0
      %v770 = vpop.f32.mrf.mxu0
      %v771 = vadd.f32 0.0, %v770
      %v772 = vpop.f32.mrf.mxu0
      %773 = vmatprep.mubr.bf16.mxu0 0
      %774 = vmatmul.mubr.bf16.gmra.mxu0 %v688
      %v775 = vpop.f32.mrf.mxu0
      %v776 = vadd.f32 0.0, %v775
      %v777 = vpop.f32.mrf.mxu0
      %v778 = vpop.f32.mrf.mxu0
      %v779 = vadd.f32 0.0, %v778
      %v780 = vpop.f32.mrf.mxu0
      %781 = vmatprep.mubr.bf16.mxu0 0
      %782 = vmatmul.mubr.bf16.gmra.mxu0 %v691
      %v783 = vpop.f32.mrf.mxu0
      %v784 = vadd.f32 0.0, %v783
      %v785 = vpop.f32.mrf.mxu0
      %v786 = vpop.f32.mrf.mxu0
      %v787 = vadd.f32 0.0, %v786
      %v788 = vpop.f32.mrf.mxu0
      %789 = vdwg.mxu0
      %v790 = vmul.f32 %v588, %v728
      %v791 = vmul.f32 %v589, %v731
      %v792 = vmul.f32 %v590, %v736
      %v793 = vmul.f32 %v591, %v739
      %v794 = vmul.f32 %v592, %v744
      %v795 = vmul.f32 %v593, %v747
      %v796 = vmul.f32 %v594, %v752
      %v797 = vmul.f32 %v595, %v755
      %v798 = vmul.f32 %v596, %v760
      %v799 = vmul.f32 %v597, %v763
      %v800 = vmul.f32 %v598, %v768
      %v801 = vmul.f32 %v599, %v771
      %v802 = vmul.f32 %v600, %v776
      %v803 = vmul.f32 %v601, %v779
      %v804 = vmul.f32 %v602, %v784
      %v805 = vmul.f32 %v603, %v787
      %v806 = vmul.f32 %v790, 0.8
      %v807 = vmul.f32 %v791, 0.8
      %v808 = vmul.f32 %v792, 0.8
      %v809 = vmul.f32 %v793, 0.8
      %v810 = vmul.f32 %v794, 0.8
      %v811 = vmul.f32 %v795, 0.8
      %v812 = vmul.f32 %v796, 0.8
      %v813 = vmul.f32 %v797, 0.8
      %v814 = vmul.f32 %v798, 0.8
      %v815 = vmul.f32 %v799, 0.8
      %v816 = vmul.f32 %v800, 0.8
      %v817 = vmul.f32 %v801, 0.8
      %v818 = vmul.f32 %v802, 0.8
      %v819 = vmul.f32 %v803, 0.8
      %v820 = vmul.f32 %v804, 0.8
      %v821 = vmul.f32 %v805, 0.8
      %v822 = vpack.c.bf16 %v807, %v806
      %v823 = vpack.c.bf16 %v809, %v808
      %v824 = vpack.c.bf16 %v811, %v810
      %v825 = vpack.c.bf16 %v813, %v812
      %v826 = vpack.c.bf16 %v815, %v814
      %v827 = vpack.c.bf16 %v817, %v816
      %v828 = vpack.c.bf16 %v819, %v818
      %v829 = vpack.c.bf16 %v821, %v820
      %v830 = vld [vmem:[%s4] sm:$0xf]
      %v831 = vld [vmem:[%s4 + $0x4] sm:$0xf]
      %v832 = vld [vmem:[%s4 + $0x8] sm:$0xf]
      %v833 = vld [vmem:[%s4 + $0xc] sm:$0xf]
      %v834 = vld [vmem:[%s4 + $0x10] sm:$0xf]
      %v835 = vld [vmem:[%s4 + $0x14] sm:$0xf]
      %v836 = vld [vmem:[%s4 + $0x18] sm:$0xf]
      %v837 = vld [vmem:[%s4 + $0x1c] sm:$0xf]
      %v838 = vld [vmem:[%s4 + $0x20] sm:$0xf]
      %v839 = vld [vmem:[%s4 + $0x24] sm:$0xf]
      %v840 = vld [vmem:[%s4 + $0x28] sm:$0xf]
      %v841 = vld [vmem:[%s4 + $0x2c] sm:$0xf]
      %v842 = vld [vmem:[%s4 + $0x30] sm:$0xf]
      %v843 = vld [vmem:[%s4 + $0x34] sm:$0xf]
      %v844 = vld [vmem:[%s4 + $0x38] sm:$0xf]
      %v845 = vld [vmem:[%s4 + $0x3c] sm:$0xf]
      %v862 = vunpack.c.l.b16 %v830
      %v863 = vunpack.c.l.b16 %v831
      %v864 = vunpack.c.l.b16 %v832
      %v865 = vunpack.c.l.b16 %v833
      %v866 = vunpack.c.l.b16 %v834
      %v867 = vunpack.c.l.b16 %v835
      %v868 = vunpack.c.l.b16 %v836
      %v869 = vunpack.c.l.b16 %v837
      %v870 = vunpack.c.l.b16 %v838
      %v871 = vunpack.c.l.b16 %v839
      %v872 = vunpack.c.l.b16 %v840
      %v873 = vunpack.c.l.b16 %v841
      %v874 = vunpack.c.l.b16 %v842
      %v875 = vunpack.c.l.b16 %v843
      %v876 = vunpack.c.l.b16 %v844
      %v877 = vunpack.c.l.b16 %v845
      %v878 = vpack.c.b16 %v863, %v862
      %v879 = vpack.c.b16 %v865, %v864
      %v880 = vpack.c.b16 %v867, %v866
      %v881 = vpack.c.b16 %v869, %v868
      %v882 = vpack.c.b16 %v871, %v870
      %v883 = vpack.c.b16 %v873, %v872
      %v884 = vpack.c.b16 %v875, %v874
      %v885 = vpack.c.b16 %v877, %v876
      %894 = vmatprep.subr.bf16.mxu0 0
      %895 = vmatpush1.bf16.msra.mxu0 %v885
      %896 = vmatprep.subr.bf16.mxu0 0
      %897 = vmatpush1.bf16.msra.mxu0 %v884
      %898 = vmatprep.subr.bf16.mxu0 0
      %899 = vmatpush1.bf16.msra.mxu0 %v883
      %900 = vmatprep.subr.bf16.mxu0 0
      %901 = vmatpush1.bf16.msra.mxu0 %v882
      %902 = vmatprep.subr.bf16.mxu0 0
      %903 = vmatpush1.bf16.msra.mxu0 %v881
      %904 = vmatprep.subr.bf16.mxu0 0
      %905 = vmatpush1.bf16.msra.mxu0 %v880
      %906 = vmatprep.subr.bf16.mxu0 0
      %907 = vmatpush1.bf16.msra.mxu0 %v879
      %908 = vmatprep.subr.bf16.mxu0 0
      %909 = vmatpush1.bf16.msra.mxu0 %v878
      %910 = vmatprep.subr.bf16.mxu0 0
      %911 = vmatpush2.bf16.msra.mxu0 0
      %912 = vmatprep.subr.bf16.mxu0 0
      %913 = vmatpush2.bf16.msra.mxu0 0
      %914 = vmatprep.subr.bf16.mxu0 0
      %915 = vmatpush2.bf16.msra.mxu0 0
      %916 = vmatprep.subr.bf16.mxu0 0
      %917 = vmatpush2.bf16.msra.mxu0 0
      %918 = vmatprep.subr.bf16.mxu0 0
      %919 = vmatpush2.bf16.msra.mxu0 0
      %920 = vmatprep.subr.bf16.mxu0 0
      %921 = vmatpush2.bf16.msra.mxu0 0
      %922 = vmatprep.subr.bf16.mxu0 0
      %923 = vmatpush2.bf16.msra.mxu0 0
      %924 = vmatprep.subr.bf16.mxu0 0
      %925 = vmatpush2.bf16.msra.mxu0 0
      %926 = vmatprep.mubr.bf16.mxu0 0
      %927 = vmatmul.mubr.bf16.gmra.mxu0 %v822
      %v928 = vpop.f32.mrf.mxu0
      %v929 = vadd.f32 0.0, %v928
      %v930 = vpop.f32.mrf.mxu0
      %v931 = vpop.f32.mrf.mxu0
      %v932 = vadd.f32 0.0, %v931
      %v933 = vpop.f32.mrf.mxu0
      %934 = vmatprep.mubr.bf16.mxu0 0
      %935 = vmatmul.mubr.bf16.gmra.mxu0 %v823
      %v936 = vpop.f32.mrf.mxu0
      %v937 = vadd.f32 0.0, %v936
      %v938 = vpop.f32.mrf.mxu0
      %v939 = vpop.f32.mrf.mxu0
      %v940 = vadd.f32 0.0, %v939
      %v941 = vpop.f32.mrf.mxu0
      %942 = vmatprep.mubr.bf16.mxu0 0
      %943 = vmatmul.mubr.bf16.gmra.mxu0 %v824
      %v944 = vpop.f32.mrf.mxu0
      %v945 = vadd.f32 0.0, %v944
      %v946 = vpop.f32.mrf.mxu0
      %v947 = vpop.f32.mrf.mxu0
      %v948 = vadd.f32 0.0, %v947
      %v949 = vpop.f32.mrf.mxu0
      %950 = vmatprep.mubr.bf16.mxu0 0
      %951 = vmatmul.mubr.bf16.gmra.mxu0 %v825
      %v952 = vpop.f32.mrf.mxu0
      %v953 = vadd.f32 0.0, %v952
      %v954 = vpop.f32.mrf.mxu0
      %v955 = vpop.f32.mrf.mxu0
      %v956 = vadd.f32 0.0, %v955
      %v957 = vpop.f32.mrf.mxu0
      %958 = vmatprep.mubr.bf16.mxu0 0
      %959 = vmatmul.mubr.bf16.gmra.mxu0 %v826
      %v960 = vpop.f32.mrf.mxu0
      %v961 = vadd.f32 0.0, %v960
      %v962 = vpop.f32.mrf.mxu0
      %v963 = vpop.f32.mrf.mxu0
      %v964 = vadd.f32 0.0, %v963
      %v965 = vpop.f32.mrf.mxu0
      %966 = vmatprep.mubr.bf16.mxu0 0
      %967 = vmatmul.mubr.bf16.gmra.mxu0 %v827
      %v968 = vpop.f32.mrf.mxu0
      %v969 = vadd.f32 0.0, %v968
      %v970 = vpop.f32.mrf.mxu0
      %v971 = vpop.f32.mrf.mxu0
      %v972 = vadd.f32 0.0, %v971
      %v973 = vpop.f32.mrf.mxu0
      %974 = vmatprep.mubr.bf16.mxu0 0
      %975 = vmatmul.mubr.bf16.gmra.mxu0 %v828
      %v976 = vpop.f32.mrf.mxu0
      %v977 = vadd.f32 0.0, %v976
      %v978 = vpop.f32.mrf.mxu0
      %v979 = vpop.f32.mrf.mxu0
      %v980 = vadd.f32 0.0, %v979
      %v981 = vpop.f32.mrf.mxu0
      %982 = vmatprep.mubr.bf16.mxu0 0
      %983 = vmatmul.mubr.bf16.gmra.mxu0 %v829
      %v984 = vpop.f32.mrf.mxu0
      %v985 = vadd.f32 0.0, %v984
      %v986 = vpop.f32.mrf.mxu0
      %v987 = vpop.f32.mrf.mxu0
      %v988 = vadd.f32 0.0, %v987
      %v989 = vpop.f32.mrf.mxu0
      %990 = vdwg.mxu0
      %v991 = vxor.u32 %v929, 2147483648
      %v992 = vxor.u32 %v932, 2147483648
      %v993 = vxor.u32 %v937, 2147483648
      %v994 = vxor.u32 %v940, 2147483648
      %v995 = vxor.u32 %v945, 2147483648
      %v996 = vxor.u32 %v948, 2147483648
      %v997 = vxor.u32 %v953, 2147483648
      %v998 = vxor.u32 %v956, 2147483648
      %v999 = vxor.u32 %v961, 2147483648
      %v1000 = vxor.u32 %v964, 2147483648
      %v1001 = vxor.u32 %v969, 2147483648
      %v1002 = vxor.u32 %v972, 2147483648
      %v1003 = vxor.u32 %v977, 2147483648
      %v1004 = vxor.u32 %v980, 2147483648
      %v1005 = vxor.u32 %v985, 2147483648
      %v1006 = vxor.u32 %v988, 2147483648
      %v1007 = vmul.f32 %v991, 1.442695
      %v1008 = vpow.pop %v1007
      %v1009 = vmul.f32 %v992, 1.442695
      %v1010 = vpow.pop %v1009
      %v1011 = vmul.f32 %v993, 1.442695
      %v1012 = vpow.pop %v1011
      %v1013 = vmul.f32 %v994, 1.442695
      %v1014 = vpow.pop %v1013
      %v1015 = vmul.f32 %v995, 1.442695
      %v1016 = vpow.pop %v1015
      %v1017 = vmul.f32 %v996, 1.442695
      %v1018 = vpow.pop %v1017
      %v1019 = vmul.f32 %v997, 1.442695
      %v1020 = vpow.pop %v1019
      %v1021 = vmul.f32 %v998, 1.442695
      %v1022 = vpow.pop %v1021
      %v1023 = vmul.f32 %v999, 1.442695
      %v1024 = vpow.pop %v1023
      %v1025 = vmul.f32 %v1000, 1.442695
      %v1026 = vpow.pop %v1025
      %v1027 = vmul.f32 %v1001, 1.442695
      %v1028 = vpow.pop %v1027
      %v1029 = vmul.f32 %v1002, 1.442695
      %v1030 = vpow.pop %v1029
      %v1031 = vmul.f32 %v1003, 1.442695
      %v1032 = vpow.pop %v1031
      %v1033 = vmul.f32 %v1004, 1.442695
      %v1034 = vpow.pop %v1033
      %v1035 = vmul.f32 %v1005, 1.442695
      %v1036 = vpow.pop %v1035
      %v1037 = vmul.f32 %v1006, 1.442695
      %v1038 = vpow.pop %v1037
      %v1039 = vadd.f32 %v1008, 1.0
      %v1040 = vadd.f32 %v1010, 1.0
      %v1041 = vadd.f32 %v1012, 1.0
      %v1042 = vadd.f32 %v1014, 1.0
      %v1043 = vadd.f32 %v1016, 1.0
      %v1044 = vadd.f32 %v1018, 1.0
      %v1045 = vadd.f32 %v1020, 1.0
      %v1046 = vadd.f32 %v1022, 1.0
      %v1047 = vadd.f32 %v1024, 1.0
      %v1048 = vadd.f32 %v1026, 1.0
      %v1049 = vadd.f32 %v1028, 1.0
      %v1050 = vadd.f32 %v1030, 1.0
      %v1051 = vadd.f32 %v1032, 1.0
      %v1052 = vadd.f32 %v1034, 1.0
      %v1053 = vadd.f32 %v1036, 1.0
      %v1054 = vadd.f32 %v1038, 1.0
      %v1055 = vrcp.pop %v1039
      %v1056 = vmul.f32 1.0, %v1055
      %v1057 = vrcp.pop %v1040
      %v1058 = vmul.f32 1.0, %v1057
      %v1059 = vrcp.pop %v1041
      %v1060 = vmul.f32 1.0, %v1059
      %v1061 = vrcp.pop %v1042
      %v1062 = vmul.f32 1.0, %v1061
      %v1063 = vrcp.pop %v1043
      %v1064 = vmul.f32 1.0, %v1063
      %v1065 = vrcp.pop %v1044
      %v1066 = vmul.f32 1.0, %v1065
      %v1067 = vrcp.pop %v1045
      %v1068 = vmul.f32 1.0, %v1067
      %v1069 = vrcp.pop %v1046
      %v1070 = vmul.f32 1.0, %v1069
      %v1071 = vrcp.pop %v1047
      %v1072 = vmul.f32 1.0, %v1071
      %v1073 = vrcp.pop %v1048
      %v1074 = vmul.f32 1.0, %v1073
      %v1075 = vrcp.pop %v1049
      %v1076 = vmul.f32 1.0, %v1075
      %v1077 = vrcp.pop %v1050
      %v1078 = vmul.f32 1.0, %v1077
      %v1079 = vrcp.pop %v1051
      %v1080 = vmul.f32 1.0, %v1079
      %v1081 = vrcp.pop %v1052
      %v1082 = vmul.f32 1.0, %v1081
      %v1083 = vrcp.pop %v1053
      %v1084 = vmul.f32 1.0, %v1083
      %v1085 = vrcp.pop %v1054
      %v1086 = vmul.f32 1.0, %v1085
      %v1087 = vmul.f32 %v929, %v1056
      %v1088 = vmul.f32 %v932, %v1058
      %v1089 = vmul.f32 %v937, %v1060
      %v1090 = vmul.f32 %v940, %v1062
      %v1091 = vmul.f32 %v945, %v1064
      %v1092 = vmul.f32 %v948, %v1066
      %v1093 = vmul.f32 %v953, %v1068
      %v1094 = vmul.f32 %v956, %v1070
      %v1095 = vmul.f32 %v961, %v1072
      %v1096 = vmul.f32 %v964, %v1074
      %v1097 = vmul.f32 %v969, %v1076
      %v1098 = vmul.f32 %v972, %v1078
      %v1099 = vmul.f32 %v977, %v1080
      %v1100 = vmul.f32 %v980, %v1082
      %v1101 = vmul.f32 %v985, %v1084
      %v1102 = vmul.f32 %v988, %v1086
      %v1103 = vmul.f32 %v1087, 1.6666666
      %v1104 = vmul.f32 %v1088, 1.6666666
      %v1105 = vmul.f32 %v1089, 1.6666666
      %v1106 = vmul.f32 %v1090, 1.6666666
      %v1107 = vmul.f32 %v1091, 1.6666666
      %v1108 = vmul.f32 %v1092, 1.6666666
      %v1109 = vmul.f32 %v1093, 1.6666666
      %v1110 = vmul.f32 %v1094, 1.6666666
      %v1111 = vmul.f32 %v1095, 1.6666666
      %v1112 = vmul.f32 %v1096, 1.6666666
      %v1113 = vmul.f32 %v1097, 1.6666666
      %v1114 = vmul.f32 %v1098, 1.6666666
      %v1115 = vmul.f32 %v1099, 1.6666666
      %v1116 = vmul.f32 %v1100, 1.6666666
      %v1117 = vmul.f32 %v1101, 1.6666666
      %v1118 = vmul.f32 %v1102, 1.6666666
      %v1119 = vpack.c.bf16 %v1104, %v1103
      %v1120 = vpack.c.bf16 %v1106, %v1105
      %v1121 = vpack.c.bf16 %v1108, %v1107
      %v1122 = vpack.c.bf16 %v1110, %v1109
      %v1123 = vpack.c.bf16 %v1112, %v1111
      %v1124 = vpack.c.bf16 %v1114, %v1113
      %v1125 = vpack.c.bf16 %v1116, %v1115
      %v1126 = vpack.c.bf16 %v1118, %v1117
      %v1135 = vunpack.c.l.b16 %v1119
      %v1136 = vunpack.c.h.b16 %v1119
      %v1137 = vunpack.c.l.b16 %v1120
      %v1138 = vunpack.c.h.b16 %v1120
      %v1139 = vunpack.c.l.b16 %v1121
      %v1140 = vunpack.c.h.b16 %v1121
      %v1141 = vunpack.c.l.b16 %v1122
      %v1142 = vunpack.c.h.b16 %v1122
      %v1143 = vunpack.c.l.b16 %v1123
      %v1144 = vunpack.c.h.b16 %v1123
      %v1145 = vunpack.c.l.b16 %v1124
      %v1146 = vunpack.c.h.b16 %v1124
      %v1147 = vunpack.c.l.b16 %v1125
      %v1148 = vunpack.c.h.b16 %v1125
      %v1149 = vunpack.c.l.b16 %v1126
      %v1150 = vunpack.c.h.b16 %v1126
      %v1151 = vpack.c.b16 %v1135, %v1135
      %v1152 = vpack.c.b16 %v1136, %v1136
      %v1153 = vpack.c.b16 %v1137, %v1137
      %v1154 = vpack.c.b16 %v1138, %v1138
      %v1155 = vpack.c.b16 %v1139, %v1139
      %v1156 = vpack.c.b16 %v1140, %v1140
      %v1157 = vpack.c.b16 %v1141, %v1141
      %v1158 = vpack.c.b16 %v1142, %v1142
      %v1159 = vpack.c.b16 %v1143, %v1143
      %v1160 = vpack.c.b16 %v1144, %v1144
      %v1161 = vpack.c.b16 %v1145, %v1145
      %v1162 = vpack.c.b16 %v1146, %v1146
      %v1163 = vpack.c.b16 %v1147, %v1147
      %v1164 = vpack.c.b16 %v1148, %v1148
      %v1165 = vpack.c.b16 %v1149, %v1149
      %v1166 = vpack.c.b16 %v1150, %v1150
      %vm1183 = vcmask 519168
      %1184 = vst.msk [vmem:[%s248] sm:$0xf] %vm1183, %v1151
      %1185 = vst.msk [vmem:[%s248 + $0x4] sm:$0xf] %vm1183, %v1152
      %1186 = vst.msk [vmem:[%s248 + $0x8] sm:$0xf] %vm1183, %v1153
      %1187 = vst.msk [vmem:[%s248 + $0xc] sm:$0xf] %vm1183, %v1154
      %1188 = vst.msk [vmem:[%s248 + $0x10] sm:$0xf] %vm1183, %v1155
      %1189 = vst.msk [vmem:[%s248 + $0x14] sm:$0xf] %vm1183, %v1156
      %1190 = vst.msk [vmem:[%s248 + $0x18] sm:$0xf] %vm1183, %v1157
      %1191 = vst.msk [vmem:[%s248 + $0x1c] sm:$0xf] %vm1183, %v1158
      %1192 = vst.msk [vmem:[%s248 + $0x20] sm:$0xf] %vm1183, %v1159
      %1193 = vst.msk [vmem:[%s248 + $0x24] sm:$0xf] %vm1183, %v1160
      %1194 = vst.msk [vmem:[%s248 + $0x28] sm:$0xf] %vm1183, %v1161
      %1195 = vst.msk [vmem:[%s248 + $0x2c] sm:$0xf] %vm1183, %v1162
      %1196 = vst.msk [vmem:[%s248 + $0x30] sm:$0xf] %vm1183, %v1163
      %1197 = vst.msk [vmem:[%s248 + $0x34] sm:$0xf] %vm1183, %v1164
      %1198 = vst.msk [vmem:[%s248 + $0x38] sm:$0xf] %vm1183, %v1165
      %1199 = vst.msk [vmem:[%s248 + $0x3c] sm:$0xf] %vm1183, %v1166
      %s1200 = smul.u32 16, %s16
      %p1201 = scmp.lt.s32.totalorder %s1200, 63
      %s1202 = scalar_select %p1201, %s1200, 63
      %s1203 = smul.addr %s1202, 4
      %s1204 = scalar_lea.vmem %s5, %s1203
      // Predicated region
      $region41: #{tpu_custom_call.1} parent=39 // pred_check
        %p1205 = pneg %p149
      $region42: #{tpu_custom_call.1} parent=39 // pred_check_branch
        %1207 = sbr.rel (%p1205) target = $region44
      $region43: #{tpu_custom_call.1} parent=39 // pred_region
        %s1208 = smul.u32 16, %s16
      $region44: #{tpu_custom_call.1} parent=39 // pred_fallthru
        _
    $region40: #{tpu_custom_call.1} parent=5 // pred_fallthru
      _
    %p1209 = scmp.le.s32.totalorder 2, %s11
    // Predicated region
    $region45: #{tpu_custom_call.1} parent=5 // pred_check
      %p1210 = pneg %p1209
    $region46: #{tpu_custom_call.1} parent=5 // pred_check_branch
      %1212 = sbr.rel (%p1210) target = $region48
    $region47: #{tpu_custom_call.1} parent=5 // pred_region
      %s1213 = ssub.s32 %s11, 2
      // Predicated region
      $region49: #{tpu_custom_call.1} parent=47 // pred_check
        %p1214 = pneg %p155
      $region50: #{tpu_custom_call.1} parent=47 // pred_check_branch
        %1216 = sbr.rel (%p1214) target = $region52
      $region51: #{tpu_custom_call.1} parent=47 // pred_region
        %s1217 = smul.u32 16, %s17
        %p1218 = scmp.lt.s32.totalorder %s1217, 63
        %s1219 = scalar_select %p1218, %s1217, 63
        %s1220 = smul.addr %s1219, 4
        %s1221 = scalar_lea.vmem %s5, %s1220
      $region52: #{tpu_custom_call.1} parent=47 // pred_fallthru
        _
    $region48: #{tpu_custom_call.1} parent=5 // pred_fallthru
      _
  $region6: #{tpu_custom_call.1} parent=0 // loop_footer
    %s15 = sadd.s32 1, %s11
  $region7: #{tpu_custom_call.1} parent=0 // loop_footer_branch
    %10 = sbr.rel target = $region3
  $region8: #{tpu_custom_call.1} parent=0 // loop_exit
    _

</llo_original>
